<compile_context>
chip_gen: v7x
topology: tpu7x:2x2x1
jax: 0.10.0
libtpu: 0.0.40
codegen_flags: <defaults>
</compile_context>

<pallas_src>
import math

import jax
import jax.numpy as jnp
from jax import lax
from jax.experimental import pallas as pl
from jax.experimental.pallas import tpu as pltpu

_NEG_BIG = -1e30  # bias for padded classes -> exp underflows to 0 in the lse


def _round_up(x: int, m: int) -> int:
    return (x + m - 1) // m * m


def _vmem_budget_bytes() -> int:
    """Per-generation scoped-VMEM budget (v7x-safe default if the query fails)."""
    cap = 64 * 1024 * 1024
    try:
        cap = int(pltpu.get_tpu_info().vmem_capacity_bytes)
    except Exception:
        pass
    # ~75% of physical VMEM, never above 100 MiB (=> 48 MiB on v7x, 96 MiB on v5e/v6e).
    return min(cap * 3 // 4, 100 * 1024 * 1024)


def _resident_vmem_bytes(tm: int, D: int, K_pad: int) -> int:
    """Rough VMEM need for the resident-W configuration (double-buffered specs)."""
    x_tile = 2 * tm * D * 4            # f32 x tile
    w_full = 2 * D * K_pad * 2         # bf16 W, resident (pipeline allocs 2 bufs)
    bias = 2 * 8 * K_pad * 4
    tgt = 2 * tm * 128 * 4             # (tm, 1) block pads to a full lane
    outs = 2 * tm * K_pad * 4 + 2 * tm * 128 * 4
    temps = 6 * tm * K_pad * 4         # headroom for in-kernel f32 temporaries
    return x_tile + w_full + bias + tgt + outs + temps


def classify_kernel(x_ref, w_ref, b_ref, tgt_ref, logits_ref, loss_ref):
    """Grid = (batch tiles,).  W/bias are VMEM-resident across all steps."""
    # ---- net forward: linear classifier (bf16 MXU matmul, f32 accumulate) ----
    x_bf = x_ref[...].astype(jnp.bfloat16)              # cast on-chip, not in HBM
    logits = jnp.dot(x_bf, w_ref[...],
                     preferred_element_type=jnp.float32) + b_ref[...]
    logits_ref[...] = logits.astype(logits_ref.dtype)   # single lane-dense store

    # ---- criterion: CrossEntropyLoss ('mean' reduction done in the wrapper) --
    m = jnp.max(logits, axis=-1, keepdims=True)          # [tm, 1]
    lse = m + jnp.log(jnp.sum(jnp.exp(logits - m), axis=-1, keepdims=True))
    cls = lax.broadcasted_iota(jnp.int32, logits.shape, 1)
    tgt_logit = jnp.sum(jnp.where(cls == tgt_ref[...], logits, 0.0),
                        axis=-1, keepdims=True)           # padded classes never match
    per_example = lse - tgt_logit                          # [tm, 1]
    loss_ref[...] = jnp.broadcast_to(per_example, loss_ref.shape)


def _dense_logits(x, w, b32):
    # Same bf16-operand / f32-accumulate semantics as the Pallas path.
    return jnp.dot(x.astype(jnp.bfloat16), w.astype(jnp.bfloat16),
                   preferred_element_type=jnp.float32) + b32


def _dense_forward(x, target, w, b32):
    logits = _dense_logits(x, w, b32)
    lse = jax.scipy.special.logsumexp(logits, axis=-1)
    tgt_logit = jnp.take_along_axis(
        logits, target[:, None].astype(jnp.int32), axis=-1)[:, 0]
    loss = jnp.mean(lse - tgt_logit)
    return logits, loss


def network_wrapper_forward(img, target, w, b, is_test=False, *,
                            tm=None, force_pallas=False):
    """Mirrors NetworkWrapper.forward: returns (output, loss, scalar_stats)."""
    B = img.shape[0]
    D = math.prod(img.shape[1:])
    K = w.shape[1]
    x = img.reshape(B, D).astype(jnp.float32)
    b32 = b.astype(jnp.float32)

    if is_test:
        # batch['meta'] contains 'test' -> loss is a constant zero.
        # (Uses the same bf16-operand matmul as the training path for consistency.)
        logits = _dense_logits(x, w, b32)
        return logits, jnp.zeros((), jnp.float32), {}

    # Small-problem fallback: grid/DMA/pipeline fixed overhead dwarfs the math.
    if not force_pallas and (2 * B * D * K) < (4 << 20):
        logits, loss = _dense_forward(x, target, w, b32)
        return logits, loss, {"loss": loss}

    # ---- tile geometry ------------------------------------------------------
    K_pad = _round_up(K, 128)                       # lane-dense class dim
    if tm is None:
        tm = 512                                    # preferred batch tile
        if B >= 32:
            # >= 2 batch tiles so the parallel axis shards across 2 TCs (v7x).
            tm = min(tm, _round_up((B + 1) // 2, 16))
        else:
            tm = _round_up(max(B, 1), 16)
    tm = max(16, _round_up(tm, 16))
    tm = min(tm, _round_up(B, 16))

    budget = _vmem_budget_bytes()
    while _resident_vmem_bytes(tm, D, K_pad) > budget and tm > 16:
        tm = max(16, tm // 2)

    if _resident_vmem_bytes(tm, D, K_pad) > budget:
        # W itself is too large to keep resident in VMEM on this generation.
        # TODO(synk): add an emit_pipeline-over-D streamed variant for very large D.
        logits, loss = _dense_forward(x, target, w, b32)
        return logits, loss, {"loss": loss}

    B_pad = _round_up(B, tm)
    nb = B_pad // tm

    # ---- operands (no materialized bf16/padded copy of x in the common case) -
    x_p = x if B_pad == B else jnp.pad(x, ((0, B_pad - B), (0, 0)))
    w_p = jnp.zeros((D, K_pad), jnp.bfloat16).at[:, :K].set(w.astype(jnp.bfloat16))
    b_p = jnp.full((1, K_pad), _NEG_BIG, jnp.float32).at[0, :K].set(b32)
    t_p = jnp.zeros((B_pad, 1), jnp.int32).at[:B, 0].set(target.astype(jnp.int32))

    grid_spec = pltpu.PrefetchScalarGridSpec(
        num_scalar_prefetch=0,
        grid=(nb,),
        in_specs=[
            pl.BlockSpec((tm, D), lambda i: (i, 0)),        # x tile (full D, f32)
            pl.BlockSpec((D, K_pad), lambda i: (0, 0)),     # W: resident, DMA'd once
            pl.BlockSpec((1, K_pad), lambda i: (0, 0)),     # bias (tiny, resident)
            pl.BlockSpec((tm, 1), lambda i: (i, 0)),        # targets (tiny)
        ],
        out_specs=(
            pl.BlockSpec((tm, K_pad), lambda i: (i, 0)),    # logits
            pl.BlockSpec((tm, 128), lambda i: (i, 0)),      # per-example loss
        ),
    )

    flops = 2 * B_pad * D * K_pad
    bytes_accessed = (x_p.size * 4          # x read once, f32
                      + w_p.size * 2        # W read once (resident)
                      + b_p.size * 4 + t_p.size * 4
                      + B_pad * K_pad * 4 + B_pad * 128 * 4)

    logits_p, loss_pe = pl.pallas_call(
        classify_kernel,
        out_shape=(
            jax.ShapeDtypeStruct((B_pad, K_pad), jnp.float32),
            jax.ShapeDtypeStruct((B_pad, 128), jnp.float32),
        ),
        grid_spec=grid_spec,
        compiler_params=pltpu.CompilerParams(
            dimension_semantics=("parallel",),
            vmem_limit_bytes=budget,
        ),
        cost_estimate=pl.CostEstimate(
            flops=flops, transcendentals=B_pad * K_pad,
            bytes_accessed=bytes_accessed),
    )(x_p, w_p, b_p, t_p)

    logits = logits_p[:B, :K]                  # drop batch / class padding
    loss = jnp.mean(loss_pe[:B, 0])            # mean over the true batch only
    scalar_stats = {"loss": loss}
    return logits, loss, scalar_stats


if __name__ == "__main__":
    key = jax.random.PRNGKey(0)
    k_img, k_tgt, k_w, k_b = jax.random.split(key, 4)

    # Small shapes consistent with an image-classification forward.
    B, C, H, W = 2, 4, 16, 16
    K = 16          # number of classes
    D = C * H * W   # flattened feature dim

    img = jax.random.normal(k_img, (B, C, H, W), dtype=jnp.float32)   # NCHW
    target = jax.random.randint(k_tgt, (B,), 0, K, dtype=jnp.int32)

    # Deterministic synthetic "net" parameters (linear classifier).
    w = jax.random.normal(k_w, (D, K), dtype=jnp.float32) * 0.02
    b = jax.random.normal(k_b, (K,), dtype=jnp.float32) * 0.01

    # Pallas path (forced: at this tiny size the auto heuristic would fall back).
    logits, loss, stats = network_wrapper_forward(img, target, w, b,
                                                  force_pallas=True)
    jax.block_until_ready((logits, loss))

    # Auto path (small-problem dense fallback) and the 'test' branch.
    logits_d, loss_d, _ = network_wrapper_forward(img, target, w, b)
    _logits_t, loss_t, _ = network_wrapper_forward(img, target, w, b, is_test=True)
    jax.block_until_ready((logits_d, loss_d, loss_t))

    # --- reference 1: exact bf16-operand path (what the kernel computes) -----
    x_flat = img.reshape(B, -1)
    x_bf = x_flat.astype(jnp.bfloat16).astype(jnp.float32)
    w_bf = w.astype(jnp.bfloat16).astype(jnp.float32)
    ref_logits = jnp.dot(x_bf, w_bf, precision=jax.lax.Precision.HIGHEST) + b
    ref_lse = jax.scipy.special.logsumexp(ref_logits, axis=-1)
    ref_loss = jnp.mean(ref_lse - ref_logits[jnp.arange(B), target])
    assert jnp.allclose(logits, ref_logits, atol=1e-3, rtol=1e-3)
    assert jnp.allclose(loss, ref_loss, atol=1e-3, rtol=1e-3)

    # --- reference 2: full-f32 module semantics (loose, bf16-feed tolerance) --
    f32_logits = jnp.dot(x_flat, w, precision=jax.lax.Precision.HIGHEST) + b
    f32_lse = jax.scipy.special.logsumexp(f32_logits, axis=-1)
    f32_loss = jnp.mean(f32_lse - f32_logits[jnp.arange(B), target])
    assert jnp.allclose(logits, f32_logits, atol=5e-2, rtol=5e-2)
    assert jnp.allclose(loss, f32_loss, atol=5e-2, rtol=5e-2)

    # --- Pallas path and dense fallback must agree (same bf16 semantics) -----
    assert jnp.allclose(logits, logits_d, atol=5e-3, rtol=5e-3)
    assert jnp.allclose(loss, loss_d, atol=5e-3, rtol=5e-3)

    assert "loss" in stats
    assert float(loss_t) == 0.0

    print("KERNEL_OK")
</pallas_src>

<mosaic_0001>
module attributes {stable_mosaic.version = 11 : i64} {
  func.func @classify_kernel(%arg0: i32, %arg1: memref<16x1024xf32, #tpu.memory_space<vmem>>, %arg2: memref<1024x128xbf16, #tpu.memory_space<vmem>>, %arg3: memref<1x128xf32, #tpu.memory_space<vmem>>, %arg4: memref<16x1xi32, #tpu.memory_space<vmem>>, %arg5: memref<16x128xf32, #tpu.memory_space<vmem>>, %arg6: memref<16x128xf32, #tpu.memory_space<vmem>>) attributes {dimension_semantics = [#tpu.dimension_semantics<parallel>], iteration_bounds = array<i64: 1>, scalar_prefetch = 0 : i64, scratch_operands = 0 : i64, tpu.core_type = #tpu.core_type<tc>, window_params = [{transform_indices = @transform_0, window_bounds = array<i64: 16, 1024>}, {pipeline_mode = #tpu.pipeline_mode<synchronous>, transform_indices = @transform_1, window_bounds = array<i64: 1024, 128>}, {pipeline_mode = #tpu.pipeline_mode<synchronous>, transform_indices = @transform_2, window_bounds = array<i64: 1, 128>}, {transform_indices = @transform_3, window_bounds = array<i64: 16, 1>}, {transform_indices = @transform_4, window_bounds = array<i64: 16, 128>}, {transform_indices = @transform_5, window_bounds = array<i64: 16, 128>}]} {
    %c0 = arith.constant 0 : index
    %c0_0 = arith.constant 0 : index
    %0 = vector.load %arg1[%c0, %c0_0] : memref<16x1024xf32, #tpu.memory_space<vmem>>, vector<16x1024xf32>
    %1 = arith.truncf %0 : vector<16x1024xf32> to vector<16x1024xbf16>
    %c0_1 = arith.constant 0 : index
    %c0_2 = arith.constant 0 : index
    %2 = vector.load %arg2[%c0_1, %c0_2] : memref<1024x128xbf16, #tpu.memory_space<vmem>>, vector<1024x128xbf16>
    %cst = arith.constant dense<0.000000e+00> : vector<16x128xf32>
    %3 = tpu.matmul %1, %2, %cst {dimension_numbers = #tpu.dot_dimension_numbers<[1], [0], [0], [1], [0, 0, 1, 1], [], []>} : vector<16x1024xbf16>, vector<1024x128xbf16>, vector<16x128xf32> -> vector<16x128xf32>
    %c0_3 = arith.constant 0 : index
    %c0_4 = arith.constant 0 : index
    %4 = vector.load %arg3[%c0_3, %c0_4] : memref<1x128xf32, #tpu.memory_space<vmem>>, vector<1x128xf32>
    %5 = vector.broadcast %4 : vector<1x128xf32> to vector<16x128xf32>
    %6 = arith.addf %3, %5 : vector<16x128xf32>
    %c0_5 = arith.constant 0 : index
    %c0_6 = arith.constant 0 : index
    %7 = vector.load %arg5[%c0_5, %c0_6] : memref<16x128xf32, #tpu.memory_space<vmem>>, vector<16x128xf32>
    tpu.vector_store %arg5[%c0_5, %c0_6], %6 {strides = array<i32>} : memref<16x128xf32, #tpu.memory_space<vmem>>, vector<16x128xf32>,
    %cst_7 = arith.constant dense<0xFF800000> : vector<16xf32>
    %8 = vector.multi_reduction <maximumf>, %6, %cst_7 [1] : vector<16x128xf32> to vector<16xf32>
    %9 = vector.shape_cast %8 : vector<16xf32> to vector<16x1xf32>
    %10 = vector.broadcast %9 : vector<16x1xf32> to vector<16x128xf32>
    %11 = arith.subf %6, %10 : vector<16x128xf32>
    %12 = math.exp %11 : vector<16x128xf32>
    %cst_8 = arith.constant dense<0.000000e+00> : vector<16xf32>
    %13 = vector.multi_reduction <add>, %12, %cst_8 [1] : vector<16x128xf32> to vector<16xf32>
    %14 = vector.shape_cast %13 : vector<16xf32> to vector<16x1xf32>
    %15 = math.log %14 : vector<16x1xf32>
    %16 = arith.addf %9, %15 : vector<16x1xf32>
    %17 = tpu.iota {dimensions = array<i32: 1>} : vector<16x128xi32>
    %c0_9 = arith.constant 0 : index
    %c0_10 = arith.constant 0 : index
    %18 = vector.load %arg4[%c0_9, %c0_10] : memref<16x1xi32, #tpu.memory_space<vmem>>, vector<16x1xi32>
    %19 = vector.broadcast %18 : vector<16x1xi32> to vector<16x128xi32>
    %20 = arith.cmpi eq, %17, %19 : vector<16x128xi32>
    %cst_11 = arith.constant 0.000000e+00 : f32
    %21 = vector.broadcast %cst_11 : f32 to vector<16x128xf32>
    %22 = arith.select %20, %6, %21 : vector<16x128xi1>, vector<16x128xf32>
    %cst_12 = arith.constant dense<0.000000e+00> : vector<16xf32>
    %23 = vector.multi_reduction <add>, %22, %cst_12 [1] : vector<16x128xf32> to vector<16xf32>
    %24 = vector.shape_cast %23 : vector<16xf32> to vector<16x1xf32>
    %25 = arith.subf %16, %24 : vector<16x1xf32>
    %26 = vector.shape_cast %25 : vector<16x1xf32> to vector<16x1xf32>
    %27 = vector.broadcast %26 : vector<16x1xf32> to vector<16x128xf32>
    %c0_13 = arith.constant 0 : index
    %c0_14 = arith.constant 0 : index
    %28 = vector.load %arg6[%c0_13, %c0_14] : memref<16x128xf32, #tpu.memory_space<vmem>>, vector<16x128xf32>
    tpu.vector_store %arg6[%c0_13, %c0_14], %27 {strides = array<i32>} : memref<16x128xf32, #tpu.memory_space<vmem>>, vector<16x128xf32>,
    return
  }
  func.func @transform_0(%arg0: i32) -> (i32, i32) {
    %c0_i32 = arith.constant 0 : i32
    %c0_i32_0 = arith.constant 0 : i32
    return %arg0, %c0_i32 : i32, i32
  }
  func.func @transform_1(%arg0: i32) -> (i32, i32) {
    %c0_i32 = arith.constant 0 : i32
    %c0_i32_0 = arith.constant 0 : i32
    %c0_i32_1 = arith.constant 0 : i32
    return %c0_i32, %c0_i32_0 : i32, i32
  }
  func.func @transform_2(%arg0: i32) -> (i32, i32) {
    %c0_i32 = arith.constant 0 : i32
    %c0_i32_0 = arith.constant 0 : i32
    %c0_i32_1 = arith.constant 0 : i32
    return %c0_i32, %c0_i32_0 : i32, i32
  }
  func.func @transform_3(%arg0: i32) -> (i32, i32) {
    %c0_i32 = arith.constant 0 : i32
    %c0_i32_0 = arith.constant 0 : i32
    return %arg0, %c0_i32 : i32, i32
  }
  func.func @transform_4(%arg0: i32) -> (i32, i32) {
    %c0_i32 = arith.constant 0 : i32
    %c0_i32_0 = arith.constant 0 : i32
    return %arg0, %c0_i32 : i32, i32
  }
  func.func @transform_5(%arg0: i32) -> (i32, i32) {
    %c0_i32 = arith.constant 0 : i32
    %c0_i32_0 = arith.constant 0 : i32
    return %arg0, %c0_i32 : i32, i32
  }
}

</mosaic_0001>

<llo_original>
// kernel: tpu_custom_call.1
$region0: #{tpu_custom_call.1}
  #allocation0 [shape = 'u32[]', space=smem, size = 0x4, offset = 0x4, fixed_abs, tag = 'smem constant byte address 0x4 - core index']
  #allocation1 [shape = 'u32[144,128]{1,0:T(1,128)}', space=vmem, size = 0x12000, scoped, tag = 'internal scratch']
  %s0 = inlined_call_operand.hbm [shape: f32[16,1024], index: 0, kind: input, shape index: {}]
  %s1 = inlined_call_operand.hbm [shape: bf16[1024,128], index: 1, kind: input, shape index: {}]
  %s2 = inlined_call_operand.vmem [shape: f32[1,128], index: 2, kind: input, shape index: {}]
  %s3 = inlined_call_operand.vmem [shape: s32[16,1], index: 3, kind: input, shape index: {}]
  %s4 = inlined_call_operand.hbm [shape: f32[16,128], index: 4, kind: output, shape index: {0}]
  %s5 = inlined_call_operand.hbm [shape: f32[16,128], index: 5, kind: output, shape index: {1}]
  %6 = xla_tuple %s4, %s5
  %s7 = sld [smem:[#allocation0]]
  $region42: #{tpu_custom_call.1} parent=0
    _
  %s9 = ssub.s32 1, %s7
  %s10 = scalar_select 0, %s9, %s7
  $region1: #{tpu_custom_call.1} parent=0
    #allocation2 [shape = 'u8[65536]{0}', space=vmem, size = 0x10000, scoped, tag = 'input window, operand 0, single buffered']
    #allocation3 [shape = 's32[1]{0}', space=sflag, size = 0x4, scoped, tag = 'scoped memory for tpu_custom_call.1']
    #allocation4 [shape = 's32[1]{0}', space=sflag, size = 0x4, scoped, tag = 'scoped memory for tpu_custom_call.1']
    #allocation5 [shape = 'u8[262144]{0}', space=vmem, size = 0x40000, scoped, tag = 'input window, operand 1, single buffered']
    #allocation6 [shape = 's32[1]{0}', space=sflag, size = 0x4, scoped, tag = 'scoped memory for tpu_custom_call.1']
    #allocation7 [shape = 'u8[8192]{0}', space=vmem, size = 0x2000, scoped, tag = 'output window, operand 0, single buffered']
    #allocation8 [shape = 'u8[8192]{0}', space=vmem, size = 0x2000, scoped, tag = 'output window, operand 1, single buffered']
    #allocation9 [shape = 's32[1]{0}', space=sflag, size = 0x4, scoped, tag = 'scoped memory for tpu_custom_call.1']
    %11 = vsyncpa [#allocation3], 0
    %12 = vsyncpa [#allocation6], 0
    %13 = vsyncpa [#allocation4], 0
    %14 = vsyncpa [#allocation9], 0
    // Predicated region
    $region2: #{tpu_custom_call.1} parent=1 // pred_check
      _
    $region3: #{tpu_custom_call.1} parent=1 // pred_check_branch
      %16 = sbr.rel (0) target = $region5
    $region4: #{tpu_custom_call.1} parent=1 // pred_region
      %s18 = ssub.s32 2048, 2048
      %19 = vsyncadd [#allocation3], %s18
      %s20 = sshll.u32 [#allocation2], 4
      %s21 = int_to_ptr.vmem [resolvable:$true] %s20
      %26 = dma.hbm_to_vmem [thread:$0]  %s0, 2048, %s21, [#allocation3], 1024, 1024, 64
    $region5: #{tpu_custom_call.1} parent=1 // pred_fallthru
      _
    // Predicated region
    $region6: #{tpu_custom_call.1} parent=1 // pred_check
      _
    $region7: #{tpu_custom_call.1} parent=1 // pred_check_branch
      %28 = sbr.rel (0) target = $region9
    $region8: #{tpu_custom_call.1} parent=1 // pred_region
      %s30 = ssub.s32 8192, 8192
      %31 = vsyncadd [#allocation6], %s30
      %s32 = sshll.u32 [#allocation5], 4
      %s33 = int_to_ptr.vmem [resolvable:$true] %s32
      %38 = dma.hbm_to_vmem [thread:$0]  %s1, 8192, %s33, [#allocation6], 64, 64, 4
    $region9: #{tpu_custom_call.1} parent=1 // pred_fallthru
      _
    // Predicated region
    $region10: #{tpu_custom_call.1} parent=1 // pred_check
      _
    $region11: #{tpu_custom_call.1} parent=1 // pred_check_branch
      %40 = sbr.rel (0) target = $region13
    $region12: #{tpu_custom_call.1} parent=1 // pred_region
      _
    $region13: #{tpu_custom_call.1} parent=1 // pred_fallthru
      _
    // Predicated region
    $region14: #{tpu_custom_call.1} parent=1 // pred_check
      _
    $region15: #{tpu_custom_call.1} parent=1 // pred_check_branch
      %42 = sbr.rel (0) target = $region17
    $region16: #{tpu_custom_call.1} parent=1 // pred_region
      _
    $region17: #{tpu_custom_call.1} parent=1 // pred_fallthru
      _
    // Predicated region
    $region18: #{tpu_custom_call.1} parent=1 // pred_check
      _
    $region19: #{tpu_custom_call.1} parent=1 // pred_check_branch
      %44 = sbr.rel (0) target = $region21
    $region20: #{tpu_custom_call.1} parent=1 // pred_region
      %45 = dma.done [#allocation3], 2048
    $region21: #{tpu_custom_call.1} parent=1 // pred_fallthru
      _
    // Predicated region
    $region22: #{tpu_custom_call.1} parent=1 // pred_check
      _
    $region23: #{tpu_custom_call.1} parent=1 // pred_check_branch
      %47 = sbr.rel (0) target = $region25
    $region24: #{tpu_custom_call.1} parent=1 // pred_region
      %48 = dma.done [#allocation6], 8192
    $region25: #{tpu_custom_call.1} parent=1 // pred_fallthru
      _
    %v50 = vld [vmem:[#allocation2] sm:$0xff]
    %v51 = vld [vmem:[#allocation2 + $0x8] sm:$0xff]
    %v52 = vld [vmem:[#allocation2 + $0x10] sm:$0xff]
    %v53 = vld [vmem:[#allocation2 + $0x18] sm:$0xff]
    %v54 = vld [vmem:[#allocation2 + $0x20] sm:$0xff]
    %v55 = vld [vmem:[#allocation2 + $0x28] sm:$0xff]
    %v56 = vld [vmem:[#allocation2 + $0x30] sm:$0xff]
    %v57 = vld [vmem:[#allocation2 + $0x38] sm:$0xff]
    %v58 = vld [vmem:[#allocation2 + $0x40] sm:$0xff]
    %v59 = vld [vmem:[#allocation2 + $0x48] sm:$0xff]
    %v60 = vld [vmem:[#allocation2 + $0x50] sm:$0xff]
    %v61 = vld [vmem:[#allocation2 + $0x58] sm:$0xff]
    %v62 = vld [vmem:[#allocation2 + $0x60] sm:$0xff]
    %v63 = vld [vmem:[#allocation2 + $0x68] sm:$0xff]
    %v64 = vld [vmem:[#allocation2 + $0x70] sm:$0xff]
    %v65 = vld [vmem:[#allocation2 + $0x78] sm:$0xff]
    %v66 = vpack.c.bf16 %v58, %v50
    %v67 = vpack.c.bf16 %v59, %v51
    %v68 = vpack.c.bf16 %v60, %v52
    %v69 = vpack.c.bf16 %v61, %v53
    %v70 = vpack.c.bf16 %v62, %v54
    %v71 = vpack.c.bf16 %v63, %v55
    %v72 = vpack.c.bf16 %v64, %v56
    %v73 = vpack.c.bf16 %v65, %v57
    %v74 = vld [vmem:[#allocation5] sm:$0xf]
    %v75 = vld [vmem:[#allocation5 + $0x4] sm:$0xf]
    %v76 = vld [vmem:[#allocation5 + $0x8] sm:$0xf]
    %v77 = vld [vmem:[#allocation5 + $0xc] sm:$0xf]
    %v78 = vld [vmem:[#allocation5 + $0x10] sm:$0xf]
    %v79 = vld [vmem:[#allocation5 + $0x14] sm:$0xf]
    %v80 = vld [vmem:[#allocation5 + $0x18] sm:$0xf]
    %v81 = vld [vmem:[#allocation5 + $0x1c] sm:$0xf]
    %v82 = vld [vmem:[#allocation5 + $0x20] sm:$0xf]
    %v83 = vld [vmem:[#allocation5 + $0x24] sm:$0xf]
    %v84 = vld [vmem:[#allocation5 + $0x28] sm:$0xf]
    %v85 = vld [vmem:[#allocation5 + $0x2c] sm:$0xf]
    %v86 = vld [vmem:[#allocation5 + $0x30] sm:$0xf]
    %v87 = vld [vmem:[#allocation5 + $0x34] sm:$0xf]
    %v88 = vld [vmem:[#allocation5 + $0x38] sm:$0xf]
    %v89 = vld [vmem:[#allocation5 + $0x3c] sm:$0xf]
    %v90 = vld [vmem:[#allocation5 + $0x40] sm:$0xf]
    %v91 = vld [vmem:[#allocation5 + $0x44] sm:$0xf]
    %v92 = vld [vmem:[#allocation5 + $0x48] sm:$0xf]
    %v93 = vld [vmem:[#allocation5 + $0x4c] sm:$0xf]
    %v94 = vld [vmem:[#allocation5 + $0x50] sm:$0xf]
    %v95 = vld [vmem:[#allocation5 + $0x54] sm:$0xf]
    %v96 = vld [vmem:[#allocation5 + $0x58] sm:$0xf]
    %v97 = vld [vmem:[#allocation5 + $0x5c] sm:$0xf]
    %v98 = vld [vmem:[#allocation5 + $0x60] sm:$0xf]
    %v99 = vld [vmem:[#allocation5 + $0x64] sm:$0xf]
    %v100 = vld [vmem:[#allocation5 + $0x68] sm:$0xf]
    %v101 = vld [vmem:[#allocation5 + $0x6c] sm:$0xf]
    %v102 = vld [vmem:[#allocation5 + $0x70] sm:$0xf]
    %v103 = vld [vmem:[#allocation5 + $0x74] sm:$0xf]
    %v104 = vld [vmem:[#allocation5 + $0x78] sm:$0xf]
    %v105 = vld [vmem:[#allocation5 + $0x7c] sm:$0xf]
    %v106 = vld [vmem:[#allocation5 + $0x80] sm:$0xf]
    %v107 = vld [vmem:[#allocation5 + $0x84] sm:$0xf]
    %v108 = vld [vmem:[#allocation5 + $0x88] sm:$0xf]
    %v109 = vld [vmem:[#allocation5 + $0x8c] sm:$0xf]
    %v110 = vld [vmem:[#allocation5 + $0x90] sm:$0xf]
    %v111 = vld [vmem:[#allocation5 + $0x94] sm:$0xf]
    %v112 = vld [vmem:[#allocation5 + $0x98] sm:$0xf]
    %v113 = vld [vmem:[#allocation5 + $0x9c] sm:$0xf]
    %v114 = vld [vmem:[#allocation5 + $0xa0] sm:$0xf]
    %v115 = vld [vmem:[#allocation5 + $0xa4] sm:$0xf]
    %v116 = vld [vmem:[#allocation5 + $0xa8] sm:$0xf]
    %v117 = vld [vmem:[#allocation5 + $0xac] sm:$0xf]
    %v118 = vld [vmem:[#allocation5 + $0xb0] sm:$0xf]
    %v119 = vld [vmem:[#allocation5 + $0xb4] sm:$0xf]
    %v120 = vld [vmem:[#allocation5 + $0xb8] sm:$0xf]
    %v121 = vld [vmem:[#allocation5 + $0xbc] sm:$0xf]
    %v122 = vld [vmem:[#allocation5 + $0xc0] sm:$0xf]
    %v123 = vld [vmem:[#allocation5 + $0xc4] sm:$0xf]
    %v124 = vld [vmem:[#allocation5 + $0xc8] sm:$0xf]
    %v125 = vld [vmem:[#allocation5 + $0xcc] sm:$0xf]
    %v126 = vld [vmem:[#allocation5 + $0xd0] sm:$0xf]
    %v127 = vld [vmem:[#allocation5 + $0xd4] sm:$0xf]
    %v128 = vld [vmem:[#allocation5 + $0xd8] sm:$0xf]
    %v129 = vld [vmem:[#allocation5 + $0xdc] sm:$0xf]
    %v130 = vld [vmem:[#allocation5 + $0xe0] sm:$0xf]
    %v131 = vld [vmem:[#allocation5 + $0xe4] sm:$0xf]
    %v132 = vld [vmem:[#allocation5 + $0xe8] sm:$0xf]
    %v133 = vld [vmem:[#allocation5 + $0xec] sm:$0xf]
    %v134 = vld [vmem:[#allocation5 + $0xf0] sm:$0xf]
    %v135 = vld [vmem:[#allocation5 + $0xf4] sm:$0xf]
    %v136 = vld [vmem:[#allocation5 + $0xf8] sm:$0xf]
    %v137 = vld [vmem:[#allocation5 + $0xfc] sm:$0xf]
    %v138 = vld [vmem:[#allocation5 + $0x100] sm:$0xf]
    %v139 = vld [vmem:[#allocation5 + $0x104] sm:$0xf]
    %v140 = vld [vmem:[#allocation5 + $0x108] sm:$0xf]
    %v141 = vld [vmem:[#allocation5 + $0x10c] sm:$0xf]
    %v142 = vld [vmem:[#allocation5 + $0x110] sm:$0xf]
    %v143 = vld [vmem:[#allocation5 + $0x114] sm:$0xf]
    %v144 = vld [vmem:[#allocation5 + $0x118] sm:$0xf]
    %v145 = vld [vmem:[#allocation5 + $0x11c] sm:$0xf]
    %v146 = vld [vmem:[#allocation5 + $0x120] sm:$0xf]
    %v147 = vld [vmem:[#allocation5 + $0x124] sm:$0xf]
    %v148 = vld [vmem:[#allocation5 + $0x128] sm:$0xf]
    %v149 = vld [vmem:[#allocation5 + $0x12c] sm:$0xf]
    %v150 = vld [vmem:[#allocation5 + $0x130] sm:$0xf]
    %v151 = vld [vmem:[#allocation5 + $0x134] sm:$0xf]
    %v152 = vld [vmem:[#allocation5 + $0x138] sm:$0xf]
    %v153 = vld [vmem:[#allocation5 + $0x13c] sm:$0xf]
    %v154 = vld [vmem:[#allocation5 + $0x140] sm:$0xf]
    %v155 = vld [vmem:[#allocation5 + $0x144] sm:$0xf]
    %v156 = vld [vmem:[#allocation5 + $0x148] sm:$0xf]
    %v157 = vld [vmem:[#allocation5 + $0x14c] sm:$0xf]
    %v158 = vld [vmem:[#allocation5 + $0x150] sm:$0xf]
    %v159 = vld [vmem:[#allocation5 + $0x154] sm:$0xf]
    %v160 = vld [vmem:[#allocation5 + $0x158] sm:$0xf]
    %v161 = vld [vmem:[#allocation5 + $0x15c] sm:$0xf]
    %v162 = vld [vmem:[#allocation5 + $0x160] sm:$0xf]
    %v163 = vld [vmem:[#allocation5 + $0x164] sm:$0xf]
    %v164 = vld [vmem:[#allocation5 + $0x168] sm:$0xf]
    %v165 = vld [vmem:[#allocation5 + $0x16c] sm:$0xf]
    %v166 = vld [vmem:[#allocation5 + $0x170] sm:$0xf]
    %v167 = vld [vmem:[#allocation5 + $0x174] sm:$0xf]
    %v168 = vld [vmem:[#allocation5 + $0x178] sm:$0xf]
    %v169 = vld [vmem:[#allocation5 + $0x17c] sm:$0xf]
    %v170 = vld [vmem:[#allocation5 + $0x180] sm:$0xf]
    %v171 = vld [vmem:[#allocation5 + $0x184] sm:$0xf]
    %v172 = vld [vmem:[#allocation5 + $0x188] sm:$0xf]
    %v173 = vld [vmem:[#allocation5 + $0x18c] sm:$0xf]
    %v174 = vld [vmem:[#allocation5 + $0x190] sm:$0xf]
    %v175 = vld [vmem:[#allocation5 + $0x194] sm:$0xf]
    %v176 = vld [vmem:[#allocation5 + $0x198] sm:$0xf]
    %v177 = vld [vmem:[#allocation5 + $0x19c] sm:$0xf]
    %v178 = vld [vmem:[#allocation5 + $0x1a0] sm:$0xf]
    %v179 = vld [vmem:[#allocation5 + $0x1a4] sm:$0xf]
    %v180 = vld [vmem:[#allocation5 + $0x1a8] sm:$0xf]
    %v181 = vld [vmem:[#allocation5 + $0x1ac] sm:$0xf]
    %v182 = vld [vmem:[#allocation5 + $0x1b0] sm:$0xf]
    %v183 = vld [vmem:[#allocation5 + $0x1b4] sm:$0xf]
    %v184 = vld [vmem:[#allocation5 + $0x1b8] sm:$0xf]
    %v185 = vld [vmem:[#allocation5 + $0x1bc] sm:$0xf]
    %v186 = vld [vmem:[#allocation5 + $0x1c0] sm:$0xf]
    %v187 = vld [vmem:[#allocation5 + $0x1c4] sm:$0xf]
    %v188 = vld [vmem:[#allocation5 + $0x1c8] sm:$0xf]
    %v189 = vld [vmem:[#allocation5 + $0x1cc] sm:$0xf]
    %v190 = vld [vmem:[#allocation5 + $0x1d0] sm:$0xf]
    %v191 = vld [vmem:[#allocation5 + $0x1d4] sm:$0xf]
    %v192 = vld [vmem:[#allocation5 + $0x1d8] sm:$0xf]
    %v193 = vld [vmem:[#allocation5 + $0x1dc] sm:$0xf]
    %v194 = vld [vmem:[#allocation5 + $0x1e0] sm:$0xf]
    %v195 = vld [vmem:[#allocation5 + $0x1e4] sm:$0xf]
    %v196 = vld [vmem:[#allocation5 + $0x1e8] sm:$0xf]
    %v197 = vld [vmem:[#allocation5 + $0x1ec] sm:$0xf]
    %v198 = vld [vmem:[#allocation5 + $0x1f0] sm:$0xf]
    %v199 = vld [vmem:[#allocation5 + $0x1f4] sm:$0xf]
    %v200 = vld [vmem:[#allocation5 + $0x1f8] sm:$0xf]
    %v201 = vld [vmem:[#allocation5 + $0x1fc] sm:$0xf]
    %v202 = vld [vmem:[%s2] sm:$0x1]
    %v204 = vlaneseq
    %v205 = vshrl.u32 %v204, 7
    %v206 = vsub.s32 0, %v205
    %v207 = vrot.slane %v202, %v206
    %v337 = vunpack.c.l.b16 %v74
    %v338 = vunpack.c.l.b16 %v75
    %v339 = vunpack.c.l.b16 %v76
    %v340 = vunpack.c.l.b16 %v77
    %v341 = vunpack.c.l.b16 %v78
    %v342 = vunpack.c.l.b16 %v79
    %v343 = vunpack.c.l.b16 %v80
    %v344 = vunpack.c.l.b16 %v81
    %v345 = vunpack.c.l.b16 %v82
    %v346 = vunpack.c.l.b16 %v83
    %v347 = vunpack.c.l.b16 %v84
    %v348 = vunpack.c.l.b16 %v85
    %v349 = vunpack.c.l.b16 %v86
    %v350 = vunpack.c.l.b16 %v87
    %v351 = vunpack.c.l.b16 %v88
    %v352 = vunpack.c.l.b16 %v89
    %v353 = vunpack.c.l.b16 %v90
    %v354 = vunpack.c.l.b16 %v91
    %v355 = vunpack.c.l.b16 %v92
    %v356 = vunpack.c.l.b16 %v93
    %v357 = vunpack.c.l.b16 %v94
    %v358 = vunpack.c.l.b16 %v95
    %v359 = vunpack.c.l.b16 %v96
    %v360 = vunpack.c.l.b16 %v97
    %v361 = vunpack.c.l.b16 %v98
    %v362 = vunpack.c.l.b16 %v99
    %v363 = vunpack.c.l.b16 %v100
    %v364 = vunpack.c.l.b16 %v101
    %v365 = vunpack.c.l.b16 %v102
    %v366 = vunpack.c.l.b16 %v103
    %v367 = vunpack.c.l.b16 %v104
    %v368 = vunpack.c.l.b16 %v105
    %v369 = vunpack.c.l.b16 %v106
    %v370 = vunpack.c.l.b16 %v107
    %v371 = vunpack.c.l.b16 %v108
    %v372 = vunpack.c.l.b16 %v109
    %v373 = vunpack.c.l.b16 %v110
    %v374 = vunpack.c.l.b16 %v111
    %v375 = vunpack.c.l.b16 %v112
    %v376 = vunpack.c.l.b16 %v113
    %v377 = vunpack.c.l.b16 %v114
    %v378 = vunpack.c.l.b16 %v115
    %v379 = vunpack.c.l.b16 %v116
    %v380 = vunpack.c.l.b16 %v117
    %v381 = vunpack.c.l.b16 %v118
    %v382 = vunpack.c.l.b16 %v119
    %v383 = vunpack.c.l.b16 %v120
    %v384 = vunpack.c.l.b16 %v121
    %v385 = vunpack.c.l.b16 %v122
    %v386 = vunpack.c.l.b16 %v123
    %v387 = vunpack.c.l.b16 %v124
    %v388 = vunpack.c.l.b16 %v125
    %v389 = vunpack.c.l.b16 %v126
    %v390 = vunpack.c.l.b16 %v127
    %v391 = vunpack.c.l.b16 %v128
    %v392 = vunpack.c.l.b16 %v129
    %v393 = vunpack.c.l.b16 %v130
    %v394 = vunpack.c.l.b16 %v131
    %v395 = vunpack.c.l.b16 %v132
    %v396 = vunpack.c.l.b16 %v133
    %v397 = vunpack.c.l.b16 %v134
    %v398 = vunpack.c.l.b16 %v135
    %v399 = vunpack.c.l.b16 %v136
    %v400 = vunpack.c.l.b16 %v137
    %v401 = vunpack.c.l.b16 %v138
    %v402 = vunpack.c.l.b16 %v139
    %v403 = vunpack.c.l.b16 %v140
    %v404 = vunpack.c.l.b16 %v141
    %v405 = vunpack.c.l.b16 %v142
    %v406 = vunpack.c.l.b16 %v143
    %v407 = vunpack.c.l.b16 %v144
    %v408 = vunpack.c.l.b16 %v145
    %v409 = vunpack.c.l.b16 %v146
    %v410 = vunpack.c.l.b16 %v147
    %v411 = vunpack.c.l.b16 %v148
    %v412 = vunpack.c.l.b16 %v149
    %v413 = vunpack.c.l.b16 %v150
    %v414 = vunpack.c.l.b16 %v151
    %v415 = vunpack.c.l.b16 %v152
    %v416 = vunpack.c.l.b16 %v153
    %v417 = vunpack.c.l.b16 %v154
    %v418 = vunpack.c.l.b16 %v155
    %v419 = vunpack.c.l.b16 %v156
    %v420 = vunpack.c.l.b16 %v157
    %v421 = vunpack.c.l.b16 %v158
    %v422 = vunpack.c.l.b16 %v159
    %v423 = vunpack.c.l.b16 %v160
    %v424 = vunpack.c.l.b16 %v161
    %v425 = vunpack.c.l.b16 %v162
    %v426 = vunpack.c.l.b16 %v163
    %v427 = vunpack.c.l.b16 %v164
    %v428 = vunpack.c.l.b16 %v165
    %v429 = vunpack.c.l.b16 %v166
    %v430 = vunpack.c.l.b16 %v167
    %v431 = vunpack.c.l.b16 %v168
    %v432 = vunpack.c.l.b16 %v169
    %v433 = vunpack.c.l.b16 %v170
    %v434 = vunpack.c.l.b16 %v171
    %v435 = vunpack.c.l.b16 %v172
    %v436 = vunpack.c.l.b16 %v173
    %v437 = vunpack.c.l.b16 %v174
    %v438 = vunpack.c.l.b16 %v175
    %v439 = vunpack.c.l.b16 %v176
    %v440 = vunpack.c.l.b16 %v177
    %v441 = vunpack.c.l.b16 %v178
    %v442 = vunpack.c.l.b16 %v179
    %v443 = vunpack.c.l.b16 %v180
    %v444 = vunpack.c.l.b16 %v181
    %v445 = vunpack.c.l.b16 %v182
    %v446 = vunpack.c.l.b16 %v183
    %v447 = vunpack.c.l.b16 %v184
    %v448 = vunpack.c.l.b16 %v185
    %v449 = vunpack.c.l.b16 %v186
    %v450 = vunpack.c.l.b16 %v187
    %v451 = vunpack.c.l.b16 %v188
    %v452 = vunpack.c.l.b16 %v189
    %v453 = vunpack.c.l.b16 %v190
    %v454 = vunpack.c.l.b16 %v191
    %v455 = vunpack.c.l.b16 %v192
    %v456 = vunpack.c.l.b16 %v193
    %v457 = vunpack.c.l.b16 %v194
    %v458 = vunpack.c.l.b16 %v195
    %v459 = vunpack.c.l.b16 %v196
    %v460 = vunpack.c.l.b16 %v197
    %v461 = vunpack.c.l.b16 %v198
    %v462 = vunpack.c.l.b16 %v199
    %v463 = vunpack.c.l.b16 %v200
    %v464 = vunpack.c.l.b16 %v201
    %v465 = vpack.c.b16 %v338, %v337
    %v466 = vpack.c.b16 %v340, %v339
    %v467 = vpack.c.b16 %v342, %v341
    %v468 = vpack.c.b16 %v344, %v343
    %v469 = vpack.c.b16 %v346, %v345
    %v470 = vpack.c.b16 %v348, %v347
    %v471 = vpack.c.b16 %v350, %v349
    %v472 = vpack.c.b16 %v352, %v351
    %v473 = vpack.c.b16 %v354, %v353
    %v474 = vpack.c.b16 %v356, %v355
    %v475 = vpack.c.b16 %v358, %v357
    %v476 = vpack.c.b16 %v360, %v359
    %v477 = vpack.c.b16 %v362, %v361
    %v478 = vpack.c.b16 %v364, %v363
    %v479 = vpack.c.b16 %v366, %v365
    %v480 = vpack.c.b16 %v368, %v367
    %v481 = vpack.c.b16 %v370, %v369
    %v482 = vpack.c.b16 %v372, %v371
    %v483 = vpack.c.b16 %v374, %v373
    %v484 = vpack.c.b16 %v376, %v375
    %v485 = vpack.c.b16 %v378, %v377
    %v486 = vpack.c.b16 %v380, %v379
    %v487 = vpack.c.b16 %v382, %v381
    %v488 = vpack.c.b16 %v384, %v383
    %v489 = vpack.c.b16 %v386, %v385
    %v490 = vpack.c.b16 %v388, %v387
    %v491 = vpack.c.b16 %v390, %v389
    %v492 = vpack.c.b16 %v392, %v391
    %v493 = vpack.c.b16 %v394, %v393
    %v494 = vpack.c.b16 %v396, %v395
    %v495 = vpack.c.b16 %v398, %v397
    %v496 = vpack.c.b16 %v400, %v399
    %v497 = vpack.c.b16 %v402, %v401
    %v498 = vpack.c.b16 %v404, %v403
    %v499 = vpack.c.b16 %v406, %v405
    %v500 = vpack.c.b16 %v408, %v407
    %v501 = vpack.c.b16 %v410, %v409
    %v502 = vpack.c.b16 %v412, %v411
    %v503 = vpack.c.b16 %v414, %v413
    %v504 = vpack.c.b16 %v416, %v415
    %v505 = vpack.c.b16 %v418, %v417
    %v506 = vpack.c.b16 %v420, %v419
    %v507 = vpack.c.b16 %v422, %v421
    %v508 = vpack.c.b16 %v424, %v423
    %v509 = vpack.c.b16 %v426, %v425
    %v510 = vpack.c.b16 %v428, %v427
    %v511 = vpack.c.b16 %v430, %v429
    %v512 = vpack.c.b16 %v432, %v431
    %v513 = vpack.c.b16 %v434, %v433
    %v514 = vpack.c.b16 %v436, %v435
    %v515 = vpack.c.b16 %v438, %v437
    %v516 = vpack.c.b16 %v440, %v439
    %v517 = vpack.c.b16 %v442, %v441
    %v518 = vpack.c.b16 %v444, %v443
    %v519 = vpack.c.b16 %v446, %v445
    %v520 = vpack.c.b16 %v448, %v447
    %v521 = vpack.c.b16 %v450, %v449
    %v522 = vpack.c.b16 %v452, %v451
    %v523 = vpack.c.b16 %v454, %v453
    %v524 = vpack.c.b16 %v456, %v455
    %v525 = vpack.c.b16 %v458, %v457
    %v526 = vpack.c.b16 %v460, %v459
    %v527 = vpack.c.b16 %v462, %v461
    %v528 = vpack.c.b16 %v464, %v463
    %593 = vmatprep.subr.bf16.mxu0 0
    %594 = vmatpush1.bf16.msra.mxu0 %v465
    %595 = vmatprep.subr.bf16.mxu0 0
    %596 = vmatpush1.bf16.msra.mxu0 %v466
    %597 = vmatprep.subr.bf16.mxu0 0
    %598 = vmatpush1.bf16.msra.mxu0 %v467
    %599 = vmatprep.subr.bf16.mxu0 0
    %600 = vmatpush1.bf16.msra.mxu0 %v468
    %601 = vmatprep.subr.bf16.mxu0 0
    %602 = vmatpush1.bf16.msra.mxu0 %v469
    %603 = vmatprep.subr.bf16.mxu0 0
    %604 = vmatpush1.bf16.msra.mxu0 %v470
    %605 = vmatprep.subr.bf16.mxu0 0
    %606 = vmatpush1.bf16.msra.mxu0 %v471
    %607 = vmatprep.subr.bf16.mxu0 0
    %608 = vmatpush1.bf16.msra.mxu0 %v472
    %609 = vmatprep.subr.bf16.mxu0 0
    %610 = vmatpush1.bf16.msra.mxu0 %v473
    %611 = vmatprep.subr.bf16.mxu0 0
    %612 = vmatpush1.bf16.msra.mxu0 %v474
    %613 = vmatprep.subr.bf16.mxu0 0
    %614 = vmatpush1.bf16.msra.mxu0 %v475
    %615 = vmatprep.subr.bf16.mxu0 0
    %616 = vmatpush1.bf16.msra.mxu0 %v476
    %617 = vmatprep.subr.bf16.mxu0 0
    %618 = vmatpush1.bf16.msra.mxu0 %v477
    %619 = vmatprep.subr.bf16.mxu0 0
    %620 = vmatpush1.bf16.msra.mxu0 %v478
    %621 = vmatprep.subr.bf16.mxu0 0
    %622 = vmatpush1.bf16.msra.mxu0 %v479
    %623 = vmatprep.subr.bf16.mxu0 0
    %624 = vmatpush1.bf16.msra.mxu0 %v480
    %625 = vmatprep.mubr.bf16.mxu0 %v67
    %626 = vmatmul.mubr.bf16.gmra.mrb[0].mxu0 %v66
    %v627 = vpop.f32.mrb[0].mxu0
    %v628 = vadd.f32 %v207, %v627
    %v629 = vpop.f32.mrb[0].mxu0
    %v630 = vpop.f32.mrb[0].mxu0
    %v631 = vadd.f32 %v207, %v630
    %v632 = vpop.f32.mrb[0].mxu0
    %633 = vdwg.mxu0
    %634 = vmatprep.subr.bf16.mxu0 0
    %635 = vmatpush1.bf16.msra.mxu0 %v481
    %636 = vmatprep.subr.bf16.mxu0 0
    %637 = vmatpush1.bf16.msra.mxu0 %v482
    %638 = vmatprep.subr.bf16.mxu0 0
    %639 = vmatpush1.bf16.msra.mxu0 %v483
    %640 = vmatprep.subr.bf16.mxu0 0
    %641 = vmatpush1.bf16.msra.mxu0 %v484
    %642 = vmatprep.subr.bf16.mxu0 0
    %643 = vmatpush1.bf16.msra.mxu0 %v485
    %644 = vmatprep.subr.bf16.mxu0 0
    %645 = vmatpush1.bf16.msra.mxu0 %v486
    %646 = vmatprep.subr.bf16.mxu0 0
    %647 = vmatpush1.bf16.msra.mxu0 %v487
    %648 = vmatprep.subr.bf16.mxu0 0
    %649 = vmatpush1.bf16.msra.mxu0 %v488
    %650 = vmatprep.subr.bf16.mxu0 0
    %651 = vmatpush1.bf16.msra.mxu0 %v489
    %652 = vmatprep.subr.bf16.mxu0 0
    %653 = vmatpush1.bf16.msra.mxu0 %v490
    %654 = vmatprep.subr.bf16.mxu0 0
    %655 = vmatpush1.bf16.msra.mxu0 %v491
    %656 = vmatprep.subr.bf16.mxu0 0
    %657 = vmatpush1.bf16.msra.mxu0 %v492
    %658 = vmatprep.subr.bf16.mxu0 0
    %659 = vmatpush1.bf16.msra.mxu0 %v493
    %660 = vmatprep.subr.bf16.mxu0 0
    %661 = vmatpush1.bf16.msra.mxu0 %v494
    %662 = vmatprep.subr.bf16.mxu0 0
    %663 = vmatpush1.bf16.msra.mxu0 %v495
    %664 = vmatprep.subr.bf16.mxu0 0
    %665 = vmatpush1.bf16.msra.mxu0 %v496
    %666 = vmatprep.mubr.bf16.mxu0 %v69
    %667 = vmatmul.mubr.bf16.gmra.mrb[0].mxu0 %v68
    %v668 = vpop.f32.mrb[0].mxu0
    %v669 = vadd.f32 %v628, %v668
    %v670 = vpop.f32.mrb[0].mxu0
    %v671 = vpop.f32.mrb[0].mxu0
    %v672 = vadd.f32 %v631, %v671
    %v673 = vpop.f32.mrb[0].mxu0
    %674 = vdwg.mxu0
    %675 = vmatprep.subr.bf16.mxu0 0
    %676 = vmatpush1.bf16.msra.mxu0 %v497
    %677 = vmatprep.subr.bf16.mxu0 0
    %678 = vmatpush1.bf16.msra.mxu0 %v498
    %679 = vmatprep.subr.bf16.mxu0 0
    %680 = vmatpush1.bf16.msra.mxu0 %v499
    %681 = vmatprep.subr.bf16.mxu0 0
    %682 = vmatpush1.bf16.msra.mxu0 %v500
    %683 = vmatprep.subr.bf16.mxu0 0
    %684 = vmatpush1.bf16.msra.mxu0 %v501
    %685 = vmatprep.subr.bf16.mxu0 0
    %686 = vmatpush1.bf16.msra.mxu0 %v502
    %687 = vmatprep.subr.bf16.mxu0 0
    %688 = vmatpush1.bf16.msra.mxu0 %v503
    %689 = vmatprep.subr.bf16.mxu0 0
    %690 = vmatpush1.bf16.msra.mxu0 %v504
    %691 = vmatprep.subr.bf16.mxu0 0
    %692 = vmatpush1.bf16.msra.mxu0 %v505
    %693 = vmatprep.subr.bf16.mxu0 0
    %694 = vmatpush1.bf16.msra.mxu0 %v506
    %695 = vmatprep.subr.bf16.mxu0 0
    %696 = vmatpush1.bf16.msra.mxu0 %v507
    %697 = vmatprep.subr.bf16.mxu0 0
    %698 = vmatpush1.bf16.msra.mxu0 %v508
    %699 = vmatprep.subr.bf16.mxu0 0
    %700 = vmatpush1.bf16.msra.mxu0 %v509
    %701 = vmatprep.subr.bf16.mxu0 0
    %702 = vmatpush1.bf16.msra.mxu0 %v510
    %703 = vmatprep.subr.bf16.mxu0 0
    %704 = vmatpush1.bf16.msra.mxu0 %v511
    %705 = vmatprep.subr.bf16.mxu0 0
    %706 = vmatpush1.bf16.msra.mxu0 %v512
    %707 = vmatprep.mubr.bf16.mxu0 %v71
    %708 = vmatmul.mubr.bf16.gmra.mrb[0].mxu0 %v70
    %v709 = vpop.f32.mrb[0].mxu0
    %v710 = vadd.f32 %v669, %v709
    %v711 = vpop.f32.mrb[0].mxu0
    %v712 = vpop.f32.mrb[0].mxu0
    %v713 = vadd.f32 %v672, %v712
    %v714 = vpop.f32.mrb[0].mxu0
    %715 = vdwg.mxu0
    %716 = vmatprep.subr.bf16.mxu0 0
    %717 = vmatpush1.bf16.msra.mxu0 %v513
    %718 = vmatprep.subr.bf16.mxu0 0
    %719 = vmatpush1.bf16.msra.mxu0 %v514
    %720 = vmatprep.subr.bf16.mxu0 0
    %721 = vmatpush1.bf16.msra.mxu0 %v515
    %722 = vmatprep.subr.bf16.mxu0 0
    %723 = vmatpush1.bf16.msra.mxu0 %v516
    %724 = vmatprep.subr.bf16.mxu0 0
    %725 = vmatpush1.bf16.msra.mxu0 %v517
    %726 = vmatprep.subr.bf16.mxu0 0
    %727 = vmatpush1.bf16.msra.mxu0 %v518
    %728 = vmatprep.subr.bf16.mxu0 0
    %729 = vmatpush1.bf16.msra.mxu0 %v519
    %730 = vmatprep.subr.bf16.mxu0 0
    %731 = vmatpush1.bf16.msra.mxu0 %v520
    %732 = vmatprep.subr.bf16.mxu0 0
    %733 = vmatpush1.bf16.msra.mxu0 %v521
    %734 = vmatprep.subr.bf16.mxu0 0
    %735 = vmatpush1.bf16.msra.mxu0 %v522
    %736 = vmatprep.subr.bf16.mxu0 0
    %737 = vmatpush1.bf16.msra.mxu0 %v523
    %738 = vmatprep.subr.bf16.mxu0 0
    %739 = vmatpush1.bf16.msra.mxu0 %v524
    %740 = vmatprep.subr.bf16.mxu0 0
    %741 = vmatpush1.bf16.msra.mxu0 %v525
    %742 = vmatprep.subr.bf16.mxu0 0
    %743 = vmatpush1.bf16.msra.mxu0 %v526
    %744 = vmatprep.subr.bf16.mxu0 0
    %745 = vmatpush1.bf16.msra.mxu0 %v527
    %746 = vmatprep.subr.bf16.mxu0 0
    %747 = vmatpush1.bf16.msra.mxu0 %v528
    %748 = vmatprep.mubr.bf16.mxu0 %v73
    %749 = vmatmul.mubr.bf16.gmra.mrb[0].mxu0 %v72
    %v750 = vpop.f32.mrb[0].mxu0
    %v751 = vadd.f32 %v710, %v750
    %v752 = vpop.f32.mrb[0].mxu0
    %v753 = vpop.f32.mrb[0].mxu0
    %v754 = vadd.f32 %v713, %v753
    %v755 = vpop.f32.mrb[0].mxu0
    %756 = vdwg.mxu0
    %757 = vst [vmem:[#allocation7] sm:$0xff] %v751
    %758 = vst [vmem:[#allocation7 + $0x8] sm:$0xff] %v754
    %759 = vmax.xlane.f32.xlu0 %v751
    %v760 = vpop.xlane.xlu0 %759
    %761 = vmax.xlane.f32.xlu0 %v754
    %v762 = vpop.xlane.xlu0 %761
    %v763 = vsub.f32 %v751, %v760
    %v764 = vsub.f32 %v754, %v762
    %v765 = vmul.f32 %v763, 1.442695
    %v766 = vpow.pop %v765
    %v767 = vmul.f32 %v764, 1.442695
    %v768 = vpow.pop %v767
    %769 = vadd.xlane.f32.xlu0 %v766
    %v770 = vpop.xlane.xlu0 %769
    %771 = vadd.xlane.f32.xlu0 %v768
    %v772 = vpop.xlane.xlu0 %771
    %v773 = vlog2.pop %v770
    %v774 = vmul.f32 %v773, 0.6931472
    %v775 = vlog2.pop %v772
    %v776 = vmul.f32 %v775, 0.6931472
    %v777 = vadd.f32 %v760, %v774
    %v778 = vadd.f32 %v762, %v776
    %v779 = vlaneseq
    %v780 = vand.u32 %v779, 127
    %v781 = vld [vmem:[%s3] sm:$0xff]
    %v782 = vld [vmem:[%s3 + $0x8] sm:$0xff]
    %783 = vset.pattern.permute.xlu0 0
    %784 = vperm.xlu0 %783, %v781
    %v785 = vpop.permute.xlu0 %784
    %786 = vset.pattern.permute.xlu0 0
    %787 = vperm.xlu0 %786, %v782
    %v788 = vpop.permute.xlu0 %787
    %vm789 = vcmp.eq.s32.totalorder %v780, %v785
    %vm790 = vcmp.eq.s32.totalorder %v780, %v788
    %v791 = vsel %vm789, %v751, 0.0
    %v792 = vsel %vm790, %v754, 0.0
    %793 = vadd.xlane.f32.xlu0 %v791
    %v794 = vpop.xlane.xlu0 %793
    %795 = vadd.xlane.f32.xlu0 %v792
    %v796 = vpop.xlane.xlu0 %795
    %v797 = vsub.f32 %v777, %v794
    %v798 = vsub.f32 %v778, %v796
    %799 = vst [vmem:[#allocation8] sm:$0xff] %v797
    %800 = vst [vmem:[#allocation8 + $0x8] sm:$0xff] %v798
    // Predicated region
    $region26: #{tpu_custom_call.1} parent=1 // pred_check
      _
    $region27: #{tpu_custom_call.1} parent=1 // pred_check_branch
      %802 = sbr.rel (0) target = $region29
    $region28: #{tpu_custom_call.1} parent=1 // pred_region
      %s804 = ssub.s32 256, 256
      %805 = vsyncadd [#allocation4], %s804
      %s806 = sshll.u32 [#allocation7], 4
      %s807 = int_to_ptr.vmem [resolvable:$true] %s806
      %812 = dma.vmem_to_hbm [thread:$0]  %s807, 256, %s4, [#allocation4], 128, 128, 8
    $region29: #{tpu_custom_call.1} parent=1 // pred_fallthru
      _
    // Predicated region
    $region30: #{tpu_custom_call.1} parent=1 // pred_check
      _
    $region31: #{tpu_custom_call.1} parent=1 // pred_check_branch
      %814 = sbr.rel (0) target = $region33
    $region32: #{tpu_custom_call.1} parent=1 // pred_region
      %s816 = ssub.s32 256, 256
      %817 = vsyncadd [#allocation9], %s816
      %s818 = sshll.u32 [#allocation8], 4
      %s819 = int_to_ptr.vmem [resolvable:$true] %s818
      %824 = dma.vmem_to_hbm [thread:$0]  %s819, 256, %s5, [#allocation9], 128, 128, 8
    $region33: #{tpu_custom_call.1} parent=1 // pred_fallthru
      _
    // Predicated region
    $region34: #{tpu_custom_call.1} parent=1 // pred_check
      _
    $region35: #{tpu_custom_call.1} parent=1 // pred_check_branch
      %826 = sbr.rel (0) target = $region37
    $region36: #{tpu_custom_call.1} parent=1 // pred_region
      %827 = dma.done [#allocation4], 256
    $region37: #{tpu_custom_call.1} parent=1 // pred_fallthru
      _
    // Predicated region
    $region38: #{tpu_custom_call.1} parent=1 // pred_check
      _
    $region39: #{tpu_custom_call.1} parent=1 // pred_check_branch
      %829 = sbr.rel (0) target = $region41
    $region40: #{tpu_custom_call.1} parent=1 // pred_region
      %830 = dma.done [#allocation9], 256
    $region41: #{tpu_custom_call.1} parent=1 // pred_fallthru
      _
    %831 = vsyncpa [#allocation3], 1
    %832 = vsyncpa [#allocation6], 1
    %833 = vsyncpa [#allocation4], 1
    %834 = vsyncpa [#allocation9], 1

</llo_original>
